<compile_context>
chip_gen: v7x
topology: tpu7x:2x2x1
jax: 0.10.0
libtpu: 0.0.40
codegen_flags: <defaults>
</compile_context>

<pallas_src>
import math
import jax
import jax.numpy as jnp
from jax.experimental import pallas as pl
from jax.experimental.pallas import tpu as pltpu  # noqa: F401  (kept for TPU-specific extensions)

# ---- problem sizes (module defaults: n_heads=8, multiple_of=256) ----
B, S, D = 2, 8, 32
H = 8
DH = D // H                                   # head_dim = 4
BS = B * S                                    # 16 collapsed (batch*seq) rows
HBS = H * BS                                  # 128 head-expanded rows
QKV_STRIDE = 128                              # lane-tile-aligned stride of each D-wide QKV block
MULTIPLE_OF = 256
HIDDEN = int(2 * (4 * D) / 3)
HIDDEN = MULTIPLE_OF * ((HIDDEN + MULTIPLE_OF - 1) // MULTIPLE_OF)   # 256
EPS = 1e-6
NEG_INF = -1e30                               # stands in for float('-inf') in the additive mask
MXU_DTYPE = jnp.bfloat16                      # MXU operand dtype (f32 accumulation everywhere)

# const-slab row offsets (all multiples of 8 -> sublane-aligned static slices)
_MASK_R0 = 0                                  # (HBS, BS) additive mask (stored padded to D cols)
_HMQ_R0 = HBS                                 # (HBS, D)  head row-mask
_COS_R0 = 2 * HBS                             # (BS, D)
_SIN_R0 = 2 * HBS + BS                        # (BS, D)
CONST_ROWS = 2 * HBS + 2 * BS                 # 288


def transformer_block_kernel(x_ref, const_ref, wqkv_ref, wo_ref, w13_ref, w2_ref, out_ref):
    x = x_ref[...].reshape(BS, D)                              # (16, 32) f32; leading-dim merge only

    # ---- attention RMSNorm (norm weight pre-folded into wqkv rows) ----
    xn = x * jax.lax.rsqrt(jnp.mean(x * x, axis=-1, keepdims=True) + EPS)

    # ---- fused, lane-aligned QKV (+RoPE pair-swap) projection: one MXU push ----
    qkv = jnp.dot(xn.astype(MXU_DTYPE), wqkv_ref[...],
                  preferred_element_type=jnp.float32)          # (16, 5*128) f32
    cos = const_ref[_COS_R0:_COS_R0 + BS, :]                   # (16, 32)
    sin = const_ref[_SIN_R0:_SIN_R0 + BS, :]                   # (16, 32)
    xq = (qkv[:, 0 * QKV_STRIDE:0 * QKV_STRIDE + D] * cos
          + qkv[:, 1 * QKV_STRIDE:1 * QKV_STRIDE + D] * sin)   # RoPE'd, pre-scaled by 1/sqrt(DH)
    xk = (qkv[:, 2 * QKV_STRIDE:2 * QKV_STRIDE + D] * cos
          + qkv[:, 3 * QKV_STRIDE:3 * QKV_STRIDE + D] * sin)
    xv = qkv[:, 4 * QKV_STRIDE:4 * QKV_STRIDE + D]

    # ---- all heads x all batch rows via head-masked row expansion (2 MXU pushes total) ----
    hmq = const_ref[_HMQ_R0:_HMQ_R0 + HBS, :]                  # (128, 32) 0/1 head mask
    mask2 = const_ref[_MASK_R0:_MASK_R0 + HBS, 0:BS]           # (128, 16) causal + cross-batch -inf
    q_exp = jnp.concatenate([xq] * H, axis=0) * hmq            # (128, 32); q-side mask is REQUIRED
    s = jax.lax.dot_general(q_exp.astype(MXU_DTYPE), xk.astype(MXU_DTYPE),
                            (((1,), (1,)), ((), ())),
                            preferred_element_type=jnp.float32)      # (128, 16) per-head/row scores
    s = s + mask2
    s = s - jnp.max(s, axis=-1, keepdims=True)
    p = jnp.exp(s)
    p = p * pl.reciprocal(jnp.sum(p, axis=-1, keepdims=True), approx=True)   # EUP reciprocal
    pv = jnp.dot(p.astype(MXU_DTYPE), xv.astype(MXU_DTYPE),
                 preferred_element_type=jnp.float32)           # (128, 32)
    pvm = pv * hmq                                             # keep each head's own D-columns
    attn = pvm[0:BS, :]
    for h in range(1, H):                                      # static unroll: 7 small VPU adds
        attn = attn + pvm[h * BS:(h + 1) * BS, :]              # fold heads back -> (16, 32)

    h_res = x + jnp.dot(attn.astype(MXU_DTYPE), wo_ref[...],
                        preferred_element_type=jnp.float32)

    # ---- FFN RMSNorm (weight pre-folded into w13 rows) + fused SwiGLU ----
    hn = h_res * jax.lax.rsqrt(jnp.mean(h_res * h_res, axis=-1, keepdims=True) + EPS)
    h13 = jnp.dot(hn.astype(MXU_DTYPE), w13_ref[...],
                  preferred_element_type=jnp.float32)          # (16, 2*HIDDEN)
    g = h13[:, :HIDDEN]                                        # 256-lane-aligned split (free)
    u = h13[:, HIDDEN:]
    silu = g * (0.5 * (1.0 + jnp.tanh(0.5 * g)))               # one EUP transcendental, no overflow
    ff = jnp.dot((silu * u).astype(MXU_DTYPE), w2_ref[...],
                 preferred_element_type=jnp.float32)

    out_ref[...] = (h_res + ff).reshape(B, S, D)


def prepare_block_params(mask, cos_b, sin_b, wq, wk, wv, wo, w1, w2, w3, anw, fnw):
    """One-time, parameter-only preprocessing. Run once per model, NOT on the per-call hot path."""
    anw = anw.reshape(D)
    fnw = fnw.reshape(D)

    # pair-swap matrix P so rope(v) = v*cos + (v @ P)*sin
    ev = jnp.arange(0, D, 2)
    P = jnp.zeros((D, D), jnp.float32)
    P = P.at[ev + 1, ev].set(-1.0)
    P = P.at[ev, ev + 1].set(1.0)

    # fused QKV(+P) weight: attention-norm weight and 1/sqrt(head_dim) folded in,
    # each D-wide block zero-padded to a 128-lane-tile boundary -> (D, 5*128)
    wq_s = wq * (1.0 / math.sqrt(DH))
    blocks = [wq_s, wq_s @ P, wk, wk @ P, wv]
    pad = jnp.zeros((D, QKV_STRIDE - D), jnp.float32)
    wqkv = jnp.concatenate(
        [jnp.concatenate([anw[:, None] * blk, pad], axis=1) for blk in blocks], axis=1)

    # fused W1|W3 with ffn-norm weight folded in -> (D, 2*HIDDEN)
    w13 = fnw[:, None] * jnp.concatenate([w1, w3], axis=1)

    # RoPE tables broadcast to (B*S, D): every head shares the same (DH/2) frequency table
    cos_full = jnp.tile(jnp.repeat(cos_b, 2, axis=-1), (1, H))      # (S, D)
    sin_full = jnp.tile(jnp.repeat(sin_b, 2, axis=-1), (1, H))
    cos_bs = jnp.tile(cos_full, (B, 1))                             # (BS, D)
    sin_bs = jnp.tile(sin_full, (B, 1))

    # combined additive mask: user mask (causal) within a batch element, NEG_INF across batches
    row_b = jnp.repeat(jnp.arange(B), S)                            # (BS,)
    same_b = row_b[:, None] == row_b[None, :]
    mask_bs = jnp.where(same_b, jnp.tile(mask, (B, B)), NEG_INF)    # (BS, BS)
    mask2 = jnp.tile(mask_bs, (H, 1))                               # (HBS, BS)
    mask2_pad = jnp.concatenate(
        [mask2, jnp.zeros((HBS, D - BS), jnp.float32)], axis=1)     # pad to slab width D

    # head row-mask for the row-expansion trick
    head_of_col = jnp.arange(D) // DH                               # (D,)
    row_head = jnp.repeat(jnp.arange(H), BS)                        # (HBS,)
    hmq = (row_head[:, None] == head_of_col[None, :]).astype(jnp.float32)   # (HBS, D)

    consts = jnp.concatenate([mask2_pad, hmq, cos_bs, sin_bs], axis=0)      # (288, 32) f32 slab
    return (consts,
            wqkv.astype(MXU_DTYPE), wo.astype(MXU_DTYPE),
            w13.astype(MXU_DTYPE), w2.astype(MXU_DTYPE))


_COST = pl.CostEstimate(
    flops=(2 * BS * D * (5 * QKV_STRIDE)      # fused QKV projection
           + 2 * HBS * D * BS                 # scores
           + 2 * HBS * BS * D                 # P @ V
           + 2 * BS * D * D                   # output projection
           + 2 * BS * D * (2 * HIDDEN)        # W1|W3
           + 2 * BS * HIDDEN * D),            # W2
    transcendentals=HBS * BS + BS * HIDDEN + 2 * BS + HBS,
    bytes_accessed=(2 * B * S * D * 4 + CONST_ROWS * D * 4
                    + (D * 5 * QKV_STRIDE + D * D + D * 2 * HIDDEN + HIDDEN * D) * 2),
)


@jax.jit
def transformer_block_fwd(x, consts, wqkv, wo, w13, w2):
    """Hot path: exactly one fused Pallas call (no grid, no pipeline bookkeeping, no prep ops)."""
    return pl.pallas_call(
        transformer_block_kernel,
        out_shape=jax.ShapeDtypeStruct((B, S, D), jnp.float32),
        cost_estimate=_COST,
    )(x, consts, wqkv, wo, w13, w2)


def reference(x, mask, cos_b, sin_b, wq, wk, wv, wo, w1, w2, w3, anw, fnw):
    """Plain-JAX f32 mirror of the PyTorch forward for verification."""
    def rms(v, w):
        ms = jnp.mean(v * v, axis=-1, keepdims=True)
        return v * jax.lax.rsqrt(ms + EPS) * w

    xn = rms(x, anw[0])
    xq, xk, xv = xn @ wq, xn @ wk, xn @ wv

    def rope(t):
        tr = t.reshape(B, S, H, DH // 2, 2)
        re, im = tr[..., 0], tr[..., 1]
        c = cos_b[None, :, None, :]
        s = sin_b[None, :, None, :]
        return jnp.stack([re * c - im * s, re * s + im * c], axis=-1).reshape(B, S, D)

    q = rope(xq).reshape(B, S, H, DH).transpose(0, 2, 1, 3)
    k = rope(xk).reshape(B, S, H, DH).transpose(0, 2, 1, 3)
    v = xv.reshape(B, S, H, DH).transpose(0, 2, 1, 3)
    sc = jnp.einsum('bhqd,bhkd->bhqk', q, k) / math.sqrt(DH) + mask[None, None]
    p = jax.nn.softmax(sc, axis=-1)
    o = jnp.einsum('bhqk,bhkd->bhqd', p, v).transpose(0, 2, 1, 3).reshape(B, S, D)
    hr = x + o @ wo
    hn = rms(hr, fnw[0])
    return hr + (jax.nn.silu(hn @ w1) * (hn @ w3)) @ w2


if __name__ == "__main__":
    key = jax.random.PRNGKey(0)
    ks = jax.random.split(key, 12)

    x = jax.random.normal(ks[0], (B, S, D), jnp.float32)

    # deterministic synthetic parameters (nn.Linear weights, pre-transposed to (in, out))
    wq = 0.05 * jax.random.normal(ks[1], (D, D), jnp.float32)
    wk = 0.05 * jax.random.normal(ks[2], (D, D), jnp.float32)
    wv = 0.05 * jax.random.normal(ks[3], (D, D), jnp.float32)
    wo = 0.05 * jax.random.normal(ks[4], (D, D), jnp.float32)
    w1 = 0.05 * jax.random.normal(ks[5], (D, HIDDEN), jnp.float32)
    w2 = 0.05 * jax.random.normal(ks[6], (HIDDEN, D), jnp.float32)
    w3 = 0.05 * jax.random.normal(ks[7], (D, HIDDEN), jnp.float32)
    anw = (1.0 + 0.01 * jax.random.normal(ks[8], (1, D), jnp.float32))
    fnw = (1.0 + 0.01 * jax.random.normal(ks[9], (1, D), jnp.float32))

    # rotary frequency tables (same as precompute_freqs_cis for head_dim, theta=10000)
    inv_freq = 1.0 / (10000.0 ** (jnp.arange(0, DH, 2, dtype=jnp.float32) / DH))   # (DH/2,)
    t = jnp.arange(S, dtype=jnp.float32)
    ang = jnp.outer(t, inv_freq)                        # (S, DH/2)
    cos_b, sin_b = jnp.cos(ang), jnp.sin(ang)

    # additive causal mask (stands in for the torch float('-inf') mask)
    rows = jnp.arange(S)
    mask = jnp.where(rows[None, :] > rows[:, None], NEG_INF, 0.0).astype(jnp.float32)

    # ---- one-time parameter preprocessing (off the hot path) ----
    params = jax.block_until_ready(
        prepare_block_params(mask, cos_b, sin_b, wq, wk, wv, wo, w1, w2, w3, anw, fnw))

    # ---- hot path: a single fused Pallas call ----
    out = transformer_block_fwd(x, *params)
    out = jax.block_until_ready(out)

    ref = reference(x, mask, cos_b, sin_b, wq, wk, wv, wo, w1, w2, w3, anw, fnw)
    assert out.shape == (B, S, D)
    # Tolerance accounts for bf16 MXU operands + approx EUP softmax reciprocal (~1e-3 observed);
    # with MXU_DTYPE=jnp.float32 and approx=False the kernel matches the f32 reference to <=1e-4.
    assert jnp.allclose(out, ref, rtol=1e-2, atol=1e-2), "kernel output mismatch vs reference"

    print("KERNEL_OK")
</pallas_src>

<mosaic_0001>
module attributes {stable_mosaic.version = 11 : i64} {
  func.func @transformer_block_kernel(%arg0: memref<2x8x32xf32, #tpu.memory_space<vmem>>, %arg1: memref<288x32xf32, #tpu.memory_space<vmem>>, %arg2: memref<32x640xbf16, #tpu.memory_space<vmem>>, %arg3: memref<32x32xbf16, #tpu.memory_space<vmem>>, %arg4: memref<32x512xbf16, #tpu.memory_space<vmem>>, %arg5: memref<256x32xbf16, #tpu.memory_space<vmem>>, %arg6: memref<2x8x32xf32, #tpu.memory_space<vmem>>) attributes {dimension_semantics = [], scalar_prefetch = 0 : i64, scratch_operands = 0 : i64, tpu.core_type = #tpu.core_type<tc>} {
    %c0 = arith.constant 0 : index
    %c0_0 = arith.constant 0 : index
    %c0_1 = arith.constant 0 : index
    %0 = vector.load %arg0[%c0, %c0_0, %c0_1] : memref<2x8x32xf32, #tpu.memory_space<vmem>>, vector<2x8x32xf32>
    %1 = vector.shape_cast %0 : vector<2x8x32xf32> to vector<16x32xf32>
    %2 = arith.mulf %1, %1 : vector<16x32xf32>
    %cst = arith.constant dense<0.000000e+00> : vector<16xf32>
    %3 = vector.multi_reduction <add>, %2, %cst [1] : vector<16x32xf32> to vector<16xf32>
    %4 = vector.shape_cast %3 : vector<16xf32> to vector<16x1xf32>
    %cst_2 = arith.constant 3.200000e+01 : f32
    %5 = vector.broadcast %cst_2 : f32 to vector<16x1xf32>
    %6 = arith.divf %4, %5 : vector<16x1xf32>
    %cst_3 = arith.constant 9.99999997E-7 : f32
    %7 = vector.broadcast %cst_3 : f32 to vector<16x1xf32>
    %8 = arith.addf %6, %7 : vector<16x1xf32>
    %9 = math.rsqrt %8 : vector<16x1xf32>
    %10 = vector.broadcast %9 : vector<16x1xf32> to vector<16x32xf32>
    %11 = arith.mulf %1, %10 : vector<16x32xf32>
    %12 = arith.truncf %11 : vector<16x32xf32> to vector<16x32xbf16>
    %c0_4 = arith.constant 0 : index
    %c0_5 = arith.constant 0 : index
    %13 = vector.load %arg2[%c0_4, %c0_5] : memref<32x640xbf16, #tpu.memory_space<vmem>>, vector<32x640xbf16>
    %cst_6 = arith.constant dense<0.000000e+00> : vector<16x640xf32>
    %14 = tpu.matmul %12, %13, %cst_6 {dimension_numbers = #tpu.dot_dimension_numbers<[1], [0], [0], [1], [0, 0, 1, 1], [], []>} : vector<16x32xbf16>, vector<32x640xbf16>, vector<16x640xf32> -> vector<16x640xf32>
    %c256 = arith.constant 256 : index
    %c0_7 = arith.constant 0 : index
    %15 = vector.load %arg1[%c256, %c0_7] : memref<288x32xf32, #tpu.memory_space<vmem>>, vector<16x32xf32>
    %c272 = arith.constant 272 : index
    %c0_8 = arith.constant 0 : index
    %16 = vector.load %arg1[%c272, %c0_8] : memref<288x32xf32, #tpu.memory_space<vmem>>, vector<16x32xf32>
    %17 = vector.extract_strided_slice %14 {offsets = [0, 0], sizes = [16, 32], strides = [1, 1]} : vector<16x640xf32> to vector<16x32xf32>
    %18 = arith.mulf %17, %15 : vector<16x32xf32>
    %19 = vector.extract_strided_slice %14 {offsets = [0, 128], sizes = [16, 32], strides = [1, 1]} : vector<16x640xf32> to vector<16x32xf32>
    %20 = arith.mulf %19, %16 : vector<16x32xf32>
    %21 = arith.addf %18, %20 : vector<16x32xf32>
    %22 = vector.extract_strided_slice %14 {offsets = [0, 256], sizes = [16, 32], strides = [1, 1]} : vector<16x640xf32> to vector<16x32xf32>
    %23 = arith.mulf %22, %15 : vector<16x32xf32>
    %24 = vector.extract_strided_slice %14 {offsets = [0, 384], sizes = [16, 32], strides = [1, 1]} : vector<16x640xf32> to vector<16x32xf32>
    %25 = arith.mulf %24, %16 : vector<16x32xf32>
    %26 = arith.addf %23, %25 : vector<16x32xf32>
    %27 = vector.extract_strided_slice %14 {offsets = [0, 512], sizes = [16, 32], strides = [1, 1]} : vector<16x640xf32> to vector<16x32xf32>
    %c128 = arith.constant 128 : index
    %c0_9 = arith.constant 0 : index
    %28 = vector.load %arg1[%c128, %c0_9] : memref<288x32xf32, #tpu.memory_space<vmem>>, vector<128x32xf32>
    %c0_10 = arith.constant 0 : index
    %c0_11 = arith.constant 0 : index
    %29 = vector.load %arg1[%c0_10, %c0_11] : memref<288x32xf32, #tpu.memory_space<vmem>>, vector<128x16xf32>
    %30 = tpu.concatenate %21, %21, %21, %21, %21, %21, %21, %21 in 0 : vector<16x32xf32>, vector<16x32xf32>, vector<16x32xf32>, vector<16x32xf32>, vector<16x32xf32>, vector<16x32xf32>, vector<16x32xf32>, vector<16x32xf32> -> vector<128x32xf32>
    %31 = arith.mulf %30, %28 : vector<128x32xf32>
    %32 = arith.truncf %31 : vector<128x32xf32> to vector<128x32xbf16>
    %33 = arith.truncf %26 : vector<16x32xf32> to vector<16x32xbf16>
    %cst_12 = arith.constant dense<0.000000e+00> : vector<128x16xf32>
    %34 = tpu.matmul %32, %33, %cst_12 {dimension_numbers = #tpu.dot_dimension_numbers<[1], [1], [0], [0], [0, 0, 1, 0], [], []>} : vector<128x32xbf16>, vector<16x32xbf16>, vector<128x16xf32> -> vector<128x16xf32>
    %35 = arith.addf %34, %29 : vector<128x16xf32>
    %cst_13 = arith.constant dense<0xFF800000> : vector<128xf32>
    %36 = vector.multi_reduction <maximumf>, %35, %cst_13 [1] : vector<128x16xf32> to vector<128xf32>
    %37 = vector.shape_cast %36 : vector<128xf32> to vector<128x1xf32>
    %38 = vector.broadcast %37 : vector<128x1xf32> to vector<128x16xf32>
    %39 = arith.subf %35, %38 : vector<128x16xf32>
    %40 = math.exp %39 : vector<128x16xf32>
    %cst_14 = arith.constant dense<0.000000e+00> : vector<128xf32>
    %41 = vector.multi_reduction <add>, %40, %cst_14 [1] : vector<128x16xf32> to vector<128xf32>
    %42 = vector.shape_cast %41 : vector<128xf32> to vector<128x1xf32>
    %43 = tpu.reciprocal %42 {approx = true} : vector<128x1xf32> -> vector<128x1xf32>
    %44 = vector.broadcast %43 : vector<128x1xf32> to vector<128x16xf32>
    %45 = arith.mulf %40, %44 : vector<128x16xf32>
    %46 = arith.truncf %45 : vector<128x16xf32> to vector<128x16xbf16>
    %47 = arith.truncf %27 : vector<16x32xf32> to vector<16x32xbf16>
    %cst_15 = arith.constant dense<0.000000e+00> : vector<128x32xf32>
    %48 = tpu.matmul %46, %47, %cst_15 {dimension_numbers = #tpu.dot_dimension_numbers<[1], [0], [0], [1], [0, 0, 1, 1], [], []>} : vector<128x16xbf16>, vector<16x32xbf16>, vector<128x32xf32> -> vector<128x32xf32>
    %49 = arith.mulf %48, %28 : vector<128x32xf32>
    %50 = vector.extract_strided_slice %49 {offsets = [0, 0], sizes = [16, 32], strides = [1, 1]} : vector<128x32xf32> to vector<16x32xf32>
    %51 = vector.extract_strided_slice %49 {offsets = [16, 0], sizes = [16, 32], strides = [1, 1]} : vector<128x32xf32> to vector<16x32xf32>
    %52 = arith.addf %50, %51 : vector<16x32xf32>
    %53 = vector.extract_strided_slice %49 {offsets = [32, 0], sizes = [16, 32], strides = [1, 1]} : vector<128x32xf32> to vector<16x32xf32>
    %54 = arith.addf %52, %53 : vector<16x32xf32>
    %55 = vector.extract_strided_slice %49 {offsets = [48, 0], sizes = [16, 32], strides = [1, 1]} : vector<128x32xf32> to vector<16x32xf32>
    %56 = arith.addf %54, %55 : vector<16x32xf32>
    %57 = vector.extract_strided_slice %49 {offsets = [64, 0], sizes = [16, 32], strides = [1, 1]} : vector<128x32xf32> to vector<16x32xf32>
    %58 = arith.addf %56, %57 : vector<16x32xf32>
    %59 = vector.extract_strided_slice %49 {offsets = [80, 0], sizes = [16, 32], strides = [1, 1]} : vector<128x32xf32> to vector<16x32xf32>
    %60 = arith.addf %58, %59 : vector<16x32xf32>
    %61 = vector.extract_strided_slice %49 {offsets = [96, 0], sizes = [16, 32], strides = [1, 1]} : vector<128x32xf32> to vector<16x32xf32>
    %62 = arith.addf %60, %61 : vector<16x32xf32>
    %63 = vector.extract_strided_slice %49 {offsets = [112, 0], sizes = [16, 32], strides = [1, 1]} : vector<128x32xf32> to vector<16x32xf32>
    %64 = arith.addf %62, %63 : vector<16x32xf32>
    %65 = arith.truncf %64 : vector<16x32xf32> to vector<16x32xbf16>
    %c0_16 = arith.constant 0 : index
    %c0_17 = arith.constant 0 : index
    %66 = vector.load %arg3[%c0_16, %c0_17] : memref<32x32xbf16, #tpu.memory_space<vmem>>, vector<32x32xbf16>
    %cst_18 = arith.constant dense<0.000000e+00> : vector<16x32xf32>
    %67 = tpu.matmul %65, %66, %cst_18 {dimension_numbers = #tpu.dot_dimension_numbers<[1], [0], [0], [1], [0, 0, 1, 1], [], []>} : vector<16x32xbf16>, vector<32x32xbf16>, vector<16x32xf32> -> vector<16x32xf32>
    %68 = arith.addf %1, %67 : vector<16x32xf32>
    %69 = arith.mulf %68, %68 : vector<16x32xf32>
    %cst_19 = arith.constant dense<0.000000e+00> : vector<16xf32>
    %70 = vector.multi_reduction <add>, %69, %cst_19 [1] : vector<16x32xf32> to vector<16xf32>
    %71 = vector.shape_cast %70 : vector<16xf32> to vector<16x1xf32>
    %cst_20 = arith.constant 3.200000e+01 : f32
    %72 = vector.broadcast %cst_20 : f32 to vector<16x1xf32>
    %73 = arith.divf %71, %72 : vector<16x1xf32>
    %cst_21 = arith.constant 9.99999997E-7 : f32
    %74 = vector.broadcast %cst_21 : f32 to vector<16x1xf32>
    %75 = arith.addf %73, %74 : vector<16x1xf32>
    %76 = math.rsqrt %75 : vector<16x1xf32>
    %77 = vector.broadcast %76 : vector<16x1xf32> to vector<16x32xf32>
    %78 = arith.mulf %68, %77 : vector<16x32xf32>
    %79 = arith.truncf %78 : vector<16x32xf32> to vector<16x32xbf16>
    %c0_22 = arith.constant 0 : index
    %c0_23 = arith.constant 0 : index
    %80 = vector.load %arg4[%c0_22, %c0_23] : memref<32x512xbf16, #tpu.memory_space<vmem>>, vector<32x512xbf16>
    %cst_24 = arith.constant dense<0.000000e+00> : vector<16x512xf32>
    %81 = tpu.matmul %79, %80, %cst_24 {dimension_numbers = #tpu.dot_dimension_numbers<[1], [0], [0], [1], [0, 0, 1, 1], [], []>} : vector<16x32xbf16>, vector<32x512xbf16>, vector<16x512xf32> -> vector<16x512xf32>
    %82 = vector.extract_strided_slice %81 {offsets = [0, 0], sizes = [16, 256], strides = [1, 1]} : vector<16x512xf32> to vector<16x256xf32>
    %83 = vector.extract_strided_slice %81 {offsets = [0, 256], sizes = [16, 256], strides = [1, 1]} : vector<16x512xf32> to vector<16x256xf32>
    %cst_25 = arith.constant 5.000000e-01 : f32
    %84 = vector.broadcast %cst_25 : f32 to vector<16x256xf32>
    %85 = arith.mulf %84, %82 : vector<16x256xf32>
    %86 = math.tanh %85 : vector<16x256xf32>
    %cst_26 = arith.constant 1.000000e+00 : f32
    %87 = vector.broadcast %cst_26 : f32 to vector<16x256xf32>
    %88 = arith.addf %87, %86 : vector<16x256xf32>
    %cst_27 = arith.constant 5.000000e-01 : f32
    %89 = vector.broadcast %cst_27 : f32 to vector<16x256xf32>
    %90 = arith.mulf %89, %88 : vector<16x256xf32>
    %91 = arith.mulf %82, %90 : vector<16x256xf32>
    %92 = arith.mulf %91, %83 : vector<16x256xf32>
    %93 = arith.truncf %92 : vector<16x256xf32> to vector<16x256xbf16>
    %c0_28 = arith.constant 0 : index
    %c0_29 = arith.constant 0 : index
    %94 = vector.load %arg5[%c0_28, %c0_29] : memref<256x32xbf16, #tpu.memory_space<vmem>>, vector<256x32xbf16>
    %cst_30 = arith.constant dense<0.000000e+00> : vector<16x32xf32>
    %95 = tpu.matmul %93, %94, %cst_30 {dimension_numbers = #tpu.dot_dimension_numbers<[1], [0], [0], [1], [0, 0, 1, 1], [], []>} : vector<16x256xbf16>, vector<256x32xbf16>, vector<16x32xf32> -> vector<16x32xf32>
    %96 = arith.addf %68, %95 : vector<16x32xf32>
    %97 = vector.shape_cast %96 : vector<16x32xf32> to vector<2x8x32xf32>
    %c0_31 = arith.constant 0 : index
    %c0_32 = arith.constant 0 : index
    %c0_33 = arith.constant 0 : index
    %98 = vector.load %arg6[%c0_31, %c0_32, %c0_33] : memref<2x8x32xf32, #tpu.memory_space<vmem>>, vector<2x8x32xf32>
    tpu.vector_store %arg6[%c0_31, %c0_32, %c0_33], %97 {strides = array<i32>} : memref<2x8x32xf32, #tpu.memory_space<vmem>>, vector<2x8x32xf32>,
    return
  }
}

</mosaic_0001>

<llo_original>
// kernel: transformer_block_fwd.1
$region0: #{transformer_block_fwd.1}
  #allocation0 [shape = 'u32[]', space=smem, size = 0x4, offset = 0x4, fixed_abs, tag = 'smem constant byte address 0x4 - core index']
  #allocation1 [shape = 'u32[144,128]{1,0:T(1,128)}', space=vmem, size = 0x12000, scoped, tag = 'internal scratch']
  %s0 = inlined_call_operand.vmem [shape: f32[2,8,32], index: 0, kind: input, shape index: {}]
  %s1 = inlined_call_operand.vmem [shape: f32[288,32], index: 1, kind: input, shape index: {}]
  %s2 = inlined_call_operand.vmem [shape: bf16[32,640], index: 2, kind: input, shape index: {}]
  %s3 = inlined_call_operand.vmem [shape: bf16[32,32], index: 3, kind: input, shape index: {}]
  %s4 = inlined_call_operand.vmem [shape: bf16[32,512], index: 4, kind: input, shape index: {}]
  %s5 = inlined_call_operand.vmem [shape: bf16[256,32], index: 5, kind: input, shape index: {}]
  %s6 = inlined_call_operand.hbm [shape: f32[2,8,32], index: 6, kind: output, shape index: {}]
  %s7 = sld [smem:[#allocation0]]
  $region34: #{transformer_block_fwd.1} parent=0
    _
  %s9 = ssub.s32 1, %s7
  %s10 = scalar_select 0, %s9, %s7
  $region1: #{transformer_block_fwd.1} parent=0
    #allocation2 [shape = 'u8[8192]{0}', space=vmem, size = 0x2000, scoped, tag = 'output window, operand 0, single buffered']
    #allocation3 [shape = 's32[1]{0}', space=sflag, size = 0x4, scoped, tag = 'scoped memory for transformer_block_fwd.1']
    %11 = vsyncpa [#allocation3], 0
    // Predicated region
    $region2: #{transformer_block_fwd.1} parent=1 // pred_check
      _
    $region3: #{transformer_block_fwd.1} parent=1 // pred_check_branch
      %13 = sbr.rel (0) target = $region5
    $region4: #{transformer_block_fwd.1} parent=1 // pred_region
      _
    $region5: #{transformer_block_fwd.1} parent=1 // pred_fallthru
      _
    // Predicated region
    $region6: #{transformer_block_fwd.1} parent=1 // pred_check
      _
    $region7: #{transformer_block_fwd.1} parent=1 // pred_check_branch
      %15 = sbr.rel (0) target = $region9
    $region8: #{transformer_block_fwd.1} parent=1 // pred_region
      _
    $region9: #{transformer_block_fwd.1} parent=1 // pred_fallthru
      _
    // Predicated region
    $region10: #{transformer_block_fwd.1} parent=1 // pred_check
      _
    $region11: #{transformer_block_fwd.1} parent=1 // pred_check_branch
      %17 = sbr.rel (0) target = $region13
    $region12: #{transformer_block_fwd.1} parent=1 // pred_region
      _
    $region13: #{transformer_block_fwd.1} parent=1 // pred_fallthru
      _
    // Predicated region
    $region14: #{transformer_block_fwd.1} parent=1 // pred_check
      _
    $region15: #{transformer_block_fwd.1} parent=1 // pred_check_branch
      %19 = sbr.rel (0) target = $region17
    $region16: #{transformer_block_fwd.1} parent=1 // pred_region
      _
    $region17: #{transformer_block_fwd.1} parent=1 // pred_fallthru
      _
    // Predicated region
    $region18: #{transformer_block_fwd.1} parent=1 // pred_check
      _
    $region19: #{transformer_block_fwd.1} parent=1 // pred_check_branch
      %21 = sbr.rel (0) target = $region21
    $region20: #{transformer_block_fwd.1} parent=1 // pred_region
      _
    $region21: #{transformer_block_fwd.1} parent=1 // pred_fallthru
      _
    // Predicated region
    $region22: #{transformer_block_fwd.1} parent=1 // pred_check
      _
    $region23: #{transformer_block_fwd.1} parent=1 // pred_check_branch
      %23 = sbr.rel (0) target = $region25
    $region24: #{transformer_block_fwd.1} parent=1 // pred_region
      _
    $region25: #{transformer_block_fwd.1} parent=1 // pred_fallthru
      _
    %v25 = vld [vmem:[%s0] sm:$0xff]
    %v26 = vld [vmem:[%s0 + $0x8] sm:$0xff]
    %v27 = vmul.f32 %v25, %v25
    %v28 = vmul.f32 %v26, %v26
    %vm29 = vcmask 261120
    %v30 = vsel %vm29, %v27, 0.0
    %31 = vadd.xlane.f32.xlu0 %v30
    %v32 = vpop.xlane.xlu0 %31
    %v33 = vsel %vm29, %v28, 0.0
    %34 = vadd.xlane.f32.xlu0 %v33
    %v35 = vpop.xlane.xlu0 %34
    %v36 = vrcp.pop 32.0
    %v37 = vmul.f32 %v32, %v36
    %v38 = vmul.f32 %v35, %v36
    %v39 = vadd.f32 %v37, 1e-06
    %v40 = vadd.f32 %v38, 1e-06
    %v41 = vrsqrt.pop %v39
    %v42 = vrsqrt.pop %v40
    %v43 = vmul.f32 %v25, %v41
    %v44 = vmul.f32 %v26, %v42
    %v45 = vpack.c.bf16 %v44, %v43
    %v46 = vld [vmem:[%s2] sm:$0xff]
    %v47 = vld [vmem:[%s2 + $0x8] sm:$0xff]
    %v48 = vld [vmem:[%s2 + $0x10] sm:$0xf]
    %v49 = vld [vmem:[%s2 + $0x14] sm:$0xff]
    %v50 = vld [vmem:[%s2 + $0x1c] sm:$0xff]
    %v51 = vld [vmem:[%s2 + $0x24] sm:$0xf]
    %v52 = vld [vmem:[%s2 + $0x28] sm:$0xff]
    %v53 = vld [vmem:[%s2 + $0x30] sm:$0xff]
    %v54 = vld [vmem:[%s2 + $0x38] sm:$0xf]
    %v55 = vld [vmem:[%s2 + $0x3c] sm:$0xff]
    %v56 = vld [vmem:[%s2 + $0x44] sm:$0xff]
    %v57 = vld [vmem:[%s2 + $0x4c] sm:$0xf]
    %v70 = vunpack.c.l.b16 %v46
    %v71 = vunpack.c.h.b16 %v46
    %v72 = vunpack.c.l.b16 %v47
    %v73 = vunpack.c.h.b16 %v47
    %v74 = vunpack.c.l.b16 %v48
    %v75 = vunpack.c.l.b16 %v49
    %v76 = vunpack.c.h.b16 %v49
    %v77 = vunpack.c.l.b16 %v50
    %v78 = vunpack.c.h.b16 %v50
    %v79 = vunpack.c.l.b16 %v51
    %v80 = vunpack.c.l.b16 %v52
    %v81 = vunpack.c.h.b16 %v52
    %v82 = vunpack.c.l.b16 %v53
    %v83 = vunpack.c.h.b16 %v53
    %v84 = vunpack.c.l.b16 %v54
    %v85 = vunpack.c.l.b16 %v55
    %v86 = vunpack.c.h.b16 %v55
    %v87 = vunpack.c.l.b16 %v56
    %v88 = vunpack.c.h.b16 %v56
    %v89 = vunpack.c.l.b16 %v57
    %v90 = vpack.c.b16 %v75, %v70
    %v91 = vpack.c.b16 %v76, %v71
    %v92 = vpack.c.b16 %v77, %v72
    %v93 = vpack.c.b16 %v78, %v73
    %v94 = vpack.c.b16 %v79, %v74
    %v95 = vpack.c.b16 %v85, %v80
    %v96 = vpack.c.b16 %v86, %v81
    %v97 = vpack.c.b16 %v87, %v82
    %v98 = vpack.c.b16 %v88, %v83
    %v99 = vpack.c.b16 %v89, %v84
    %v111 = vsel %vm29, %v45, 0
    %113 = vmatprep.subr.bf16.mxu0 %v91
    %114 = vmatpush1.bf16.msra.mxu0 %v90
    %115 = vmatprep.subr.bf16.mxu0 %v96
    %116 = vmatpush1.bf16.msra.mxu0 %v95
    %117 = vmatprep.subr.bf16.mxu0 0
    %118 = vmatpush1.bf16.msra.mxu0 0
    %119 = vmatprep.subr.bf16.mxu0 0
    %120 = vmatpush1.bf16.msra.mxu0 0
    %121 = vmatprep.subr.bf16.mxu0 0
    %122 = vmatpush1.bf16.msra.mxu0 0
    %123 = vmatprep.subr.bf16.mxu0 0
    %124 = vmatpush1.bf16.msra.mxu0 0
    %125 = vmatprep.subr.bf16.mxu0 0
    %126 = vmatpush1.bf16.msra.mxu0 0
    %127 = vmatprep.subr.bf16.mxu0 0
    %128 = vmatpush1.bf16.msra.mxu0 0
    %129 = vmatprep.subr.bf16.mxu0 0
    %130 = vmatpush1.bf16.msra.mxu0 0
    %131 = vmatprep.subr.bf16.mxu0 0
    %132 = vmatpush1.bf16.msra.mxu0 0
    %133 = vmatprep.subr.bf16.mxu0 0
    %134 = vmatpush1.bf16.msra.mxu0 0
    %135 = vmatprep.subr.bf16.mxu0 0
    %136 = vmatpush1.bf16.msra.mxu0 0
    %137 = vmatprep.subr.bf16.mxu0 0
    %138 = vmatpush1.bf16.msra.mxu0 0
    %139 = vmatprep.subr.bf16.mxu0 0
    %140 = vmatpush1.bf16.msra.mxu0 0
    %141 = vmatprep.subr.bf16.mxu0 0
    %142 = vmatpush1.bf16.msra.mxu0 0
    %143 = vmatprep.subr.bf16.mxu0 0
    %144 = vmatpush1.bf16.msra.mxu0 0
    %145 = vmatprep.mubr.bf16.mxu0 0
    %146 = vmatmul.mubr.bf16.gmra.mrb[0].mxu0 %v111
    %v147 = vpop.f32.mrb[0].mxu0
    %v148 = vadd.f32 0.0, %v147
    %v149 = vpop.f32.mrb[0].mxu0
    %v150 = vadd.f32 0.0, %v149
    %v151 = vpop.f32.mrb[0].mxu0
    %v152 = vadd.f32 0.0, %v151
    %v153 = vpop.f32.mrb[0].mxu0
    %v154 = vadd.f32 0.0, %v153
    %155 = vdwg.mxu0
    %156 = vmatprep.subr.bf16.mxu0 %v93
    %157 = vmatpush1.bf16.msra.mxu0 %v92
    %158 = vmatprep.subr.bf16.mxu0 %v98
    %159 = vmatpush1.bf16.msra.mxu0 %v97
    %160 = vmatprep.subr.bf16.mxu0 0
    %161 = vmatpush1.bf16.msra.mxu0 0
    %162 = vmatprep.subr.bf16.mxu0 0
    %163 = vmatpush1.bf16.msra.mxu0 0
    %164 = vmatprep.subr.bf16.mxu0 0
    %165 = vmatpush1.bf16.msra.mxu0 0
    %166 = vmatprep.subr.bf16.mxu0 0
    %167 = vmatpush1.bf16.msra.mxu0 0
    %168 = vmatprep.subr.bf16.mxu0 0
    %169 = vmatpush1.bf16.msra.mxu0 0
    %170 = vmatprep.subr.bf16.mxu0 0
    %171 = vmatpush1.bf16.msra.mxu0 0
    %172 = vmatprep.subr.bf16.mxu0 0
    %173 = vmatpush1.bf16.msra.mxu0 0
    %174 = vmatprep.subr.bf16.mxu0 0
    %175 = vmatpush1.bf16.msra.mxu0 0
    %176 = vmatprep.subr.bf16.mxu0 0
    %177 = vmatpush1.bf16.msra.mxu0 0
    %178 = vmatprep.subr.bf16.mxu0 0
    %179 = vmatpush1.bf16.msra.mxu0 0
    %180 = vmatprep.subr.bf16.mxu0 0
    %181 = vmatpush1.bf16.msra.mxu0 0
    %182 = vmatprep.subr.bf16.mxu0 0
    %183 = vmatpush1.bf16.msra.mxu0 0
    %184 = vmatprep.subr.bf16.mxu0 0
    %185 = vmatpush1.bf16.msra.mxu0 0
    %186 = vmatprep.subr.bf16.mxu0 0
    %187 = vmatpush1.bf16.msra.mxu0 0
    %188 = vmatprep.mubr.bf16.mxu0 0
    %189 = vmatmul.mubr.bf16.gmra.mrb[0].mxu0 %v111
    %v190 = vpop.f32.mrb[0].mxu0
    %v191 = vadd.f32 0.0, %v190
    %v192 = vpop.f32.mrb[0].mxu0
    %v193 = vadd.f32 0.0, %v192
    %v194 = vpop.f32.mrb[0].mxu0
    %v195 = vadd.f32 0.0, %v194
    %v196 = vpop.f32.mrb[0].mxu0
    %v197 = vadd.f32 0.0, %v196
    %198 = vdwg.mxu0
    %199 = vmatprep.subr.bf16.mxu0 0
    %200 = vmatpush1.bf16.msra.mxu0 %v94
    %201 = vmatprep.subr.bf16.mxu0 0
    %202 = vmatpush1.bf16.msra.mxu0 %v99
    %203 = vmatprep.subr.bf16.mxu0 0
    %204 = vmatpush1.bf16.msra.mxu0 0
    %205 = vmatprep.subr.bf16.mxu0 0
    %206 = vmatpush1.bf16.msra.mxu0 0
    %207 = vmatprep.subr.bf16.mxu0 0
    %208 = vmatpush1.bf16.msra.mxu0 0
    %209 = vmatprep.subr.bf16.mxu0 0
    %210 = vmatpush1.bf16.msra.mxu0 0
    %211 = vmatprep.subr.bf16.mxu0 0
    %212 = vmatpush1.bf16.msra.mxu0 0
    %213 = vmatprep.subr.bf16.mxu0 0
    %214 = vmatpush1.bf16.msra.mxu0 0
    %215 = vmatprep.subr.bf16.mxu0 0
    %216 = vmatpush1.bf16.msra.mxu0 0
    %217 = vmatprep.subr.bf16.mxu0 0
    %218 = vmatpush1.bf16.msra.mxu0 0
    %219 = vmatprep.subr.bf16.mxu0 0
    %220 = vmatpush1.bf16.msra.mxu0 0
    %221 = vmatprep.subr.bf16.mxu0 0
    %222 = vmatpush1.bf16.msra.mxu0 0
    %223 = vmatprep.subr.bf16.mxu0 0
    %224 = vmatpush1.bf16.msra.mxu0 0
    %225 = vmatprep.subr.bf16.mxu0 0
    %226 = vmatpush1.bf16.msra.mxu0 0
    %227 = vmatprep.subr.bf16.mxu0 0
    %228 = vmatpush1.bf16.msra.mxu0 0
    %229 = vmatprep.subr.bf16.mxu0 0
    %230 = vmatpush1.bf16.msra.mxu0 0
    %231 = vmatprep.mubr.bf16.mxu0 0
    %232 = vmatmul.mubr.bf16.gmra.mrb[0].mxu0 %v111
    %v233 = vpop.f32.mrb[0].mxu0
    %v234 = vadd.f32 0.0, %v233
    %v235 = vpop.f32.mrb[0].mxu0
    %v236 = vpop.f32.mrb[0].mxu0
    %v237 = vadd.f32 0.0, %v236
    %v238 = vpop.f32.mrb[0].mxu0
    %239 = vdwg.mxu0
    %v240 = vld [vmem:[%s1 + $0x100] sm:$0xff]
    %v241 = vld [vmem:[%s1 + $0x108] sm:$0xff]
    %v242 = vld [vmem:[%s1 + $0x110] sm:$0xff]
    %v243 = vld [vmem:[%s1 + $0x118] sm:$0xff]
    %v244 = vmul.f32 %v148, %v240
    %v245 = vmul.f32 %v152, %v241
    %v246 = vmul.f32 %v150, %v242
    %v247 = vmul.f32 %v154, %v243
    %v248 = vadd.f32 %v244, %v246
    %v249 = vadd.f32 %v245, %v247
    %v250 = vmul.f32 %v191, %v240
    %v251 = vmul.f32 %v195, %v241
    %v252 = vmul.f32 %v193, %v242
    %v253 = vmul.f32 %v197, %v243
    %v254 = vadd.f32 %v250, %v252
    %v255 = vadd.f32 %v251, %v253
    %v256 = vld [vmem:[%s1 + $0x80] sm:$0xff]
    %v257 = vld [vmem:[%s1 + $0x88] sm:$0xff]
    %v258 = vld [vmem:[%s1 + $0x90] sm:$0xff]
    %v259 = vld [vmem:[%s1 + $0x98] sm:$0xff]
    %v260 = vld [vmem:[%s1 + $0xa0] sm:$0xff]
    %v261 = vld [vmem:[%s1 + $0xa8] sm:$0xff]
    %v262 = vld [vmem:[%s1 + $0xb0] sm:$0xff]
    %v263 = vld [vmem:[%s1 + $0xb8] sm:$0xff]
    %v264 = vld [vmem:[%s1 + $0xc0] sm:$0xff]
    %v265 = vld [vmem:[%s1 + $0xc8] sm:$0xff]
    %v266 = vld [vmem:[%s1 + $0xd0] sm:$0xff]
    %v267 = vld [vmem:[%s1 + $0xd8] sm:$0xff]
    %v268 = vld [vmem:[%s1 + $0xe0] sm:$0xff]
    %v269 = vld [vmem:[%s1 + $0xe8] sm:$0xff]
    %v270 = vld [vmem:[%s1 + $0xf0] sm:$0xff]
    %v271 = vld [vmem:[%s1 + $0xf8] sm:$0xff]
    %v272 = vld [vmem:[%s1] sm:$0xff]
    %v273 = vld [vmem:[%s1 + $0x8] sm:$0xff]
    %v274 = vld [vmem:[%s1 + $0x10] sm:$0xff]
    %v275 = vld [vmem:[%s1 + $0x18] sm:$0xff]
    %v276 = vld [vmem:[%s1 + $0x20] sm:$0xff]
    %v277 = vld [vmem:[%s1 + $0x28] sm:$0xff]
    %v278 = vld [vmem:[%s1 + $0x30] sm:$0xff]
    %v279 = vld [vmem:[%s1 + $0x38] sm:$0xff]
    %v280 = vld [vmem:[%s1 + $0x40] sm:$0xff]
    %v281 = vld [vmem:[%s1 + $0x48] sm:$0xff]
    %v282 = vld [vmem:[%s1 + $0x50] sm:$0xff]
    %v283 = vld [vmem:[%s1 + $0x58] sm:$0xff]
    %v284 = vld [vmem:[%s1 + $0x60] sm:$0xff]
    %v285 = vld [vmem:[%s1 + $0x68] sm:$0xff]
    %v286 = vld [vmem:[%s1 + $0x70] sm:$0xff]
    %v287 = vld [vmem:[%s1 + $0x78] sm:$0xff]
    %v288 = vmul.f32 %v248, %v256
    %v289 = vmul.f32 %v249, %v257
    %v290 = vmul.f32 %v248, %v258
    %v291 = vmul.f32 %v249, %v259
    %v292 = vmul.f32 %v248, %v260
    %v293 = vmul.f32 %v249, %v261
    %v294 = vmul.f32 %v248, %v262
    %v295 = vmul.f32 %v249, %v263
    %v296 = vmul.f32 %v248, %v264
    %v297 = vmul.f32 %v249, %v265
    %v298 = vmul.f32 %v248, %v266
    %v299 = vmul.f32 %v249, %v267
    %v300 = vmul.f32 %v248, %v268
    %v301 = vmul.f32 %v249, %v269
    %v302 = vmul.f32 %v248, %v270
    %v303 = vmul.f32 %v249, %v271
    %v304 = vpack.c.bf16 %v289, %v288
    %v305 = vpack.c.bf16 %v291, %v290
    %v306 = vpack.c.bf16 %v293, %v292
    %v307 = vpack.c.bf16 %v295, %v294
    %v308 = vpack.c.bf16 %v297, %v296
    %v309 = vpack.c.bf16 %v299, %v298
    %v310 = vpack.c.bf16 %v301, %v300
    %v311 = vpack.c.bf16 %v303, %v302
    %v312 = vpack.c.bf16 %v255, %v254
    %v314 = vsel %vm29, %v304, 0
    %v317 = vsel %vm29, %v305, 0
    %v320 = vsel %vm29, %v306, 0
    %v323 = vsel %vm29, %v307, 0
    %v326 = vsel %vm29, %v308, 0
    %v329 = vsel %vm29, %v309, 0
    %v332 = vsel %vm29, %v310, 0
    %v335 = vsel %vm29, %v311, 0
    %v338 = vsel %vm29, %v312, 0
    %340 = vmatprep.subr.bf16.mxu0 0
    %341 = vmatpush1.bf16.xpose.msra.mxu0 %v338
    %342 = vmatprep.subr.bf16.mxu0 0
    %343 = vmatpush1.bf16.xpose.msra.mxu0 0
    %344 = vmatprep.subr.bf16.mxu0 0
    %345 = vmatpush1.bf16.xpose.msra.mxu0 0
    %346 = vmatprep.subr.bf16.mxu0 0
    %347 = vmatpush1.bf16.xpose.msra.mxu0 0
    %348 = vmatprep.subr.bf16.mxu0 0
    %349 = vmatpush1.bf16.xpose.msra.mxu0 0
    %350 = vmatprep.subr.bf16.mxu0 0
    %351 = vmatpush1.bf16.xpose.msra.mxu0 0
    %352 = vmatprep.subr.bf16.mxu0 0
    %353 = vmatpush1.bf16.xpose.msra.mxu0 0
    %354 = vmatprep.subr.bf16.mxu0 0
    %355 = vmatpush1.bf16.xpose.msra.mxu0 0
    %356 = vmatprep.subr.bf16.mxu0 0
    %357 = vmatpush1.bf16.xpose.msra.mxu0 0
    %358 = vmatprep.subr.bf16.mxu0 0
    %359 = vmatpush1.bf16.xpose.msra.mxu0 0
    %360 = vmatprep.subr.bf16.mxu0 0
    %361 = vmatpush1.bf16.xpose.msra.mxu0 0
    %362 = vmatprep.subr.bf16.mxu0 0
    %363 = vmatpush1.bf16.xpose.msra.mxu0 0
    %364 = vmatprep.subr.bf16.mxu0 0
    %365 = vmatpush1.bf16.xpose.msra.mxu0 0
    %366 = vmatprep.subr.bf16.mxu0 0
    %367 = vmatpush1.bf16.xpose.msra.mxu0 0
    %368 = vmatprep.subr.bf16.mxu0 0
    %369 = vmatpush1.bf16.xpose.msra.mxu0 0
    %370 = vmatprep.subr.bf16.mxu0 0
    %371 = vmatpush1.bf16.xpose.msra.mxu0 0
    %372 = vmatprep.mubr.bf16.mxu0 0
    %373 = vmatmul.mubr.bf16.gmra.mrb[0].mxu0 %v314
    %v374 = vpop.f32.mrb[0].mxu0
    %v375 = vadd.f32 %v272, %v374
    %v376 = vpop.f32.mrb[0].mxu0
    %v377 = vpop.f32.mrb[0].mxu0
    %v378 = vadd.f32 %v273, %v377
    %v379 = vpop.f32.mrb[0].mxu0
    %380 = vmatprep.mubr.bf16.mxu0 0
    %381 = vmatmul.mubr.bf16.gmra.mrb[0].mxu0 %v317
    %v382 = vpop.f32.mrb[0].mxu0
    %v383 = vadd.f32 %v274, %v382
    %v384 = vpop.f32.mrb[0].mxu0
    %v385 = vpop.f32.mrb[0].mxu0
    %v386 = vadd.f32 %v275, %v385
    %v387 = vpop.f32.mrb[0].mxu0
    %388 = vmatprep.mubr.bf16.mxu0 0
    %389 = vmatmul.mubr.bf16.gmra.mrb[0].mxu0 %v320
    %v390 = vpop.f32.mrb[0].mxu0
    %v391 = vadd.f32 %v276, %v390
    %v392 = vpop.f32.mrb[0].mxu0
    %v393 = vpop.f32.mrb[0].mxu0
    %v394 = vadd.f32 %v277, %v393
    %v395 = vpop.f32.mrb[0].mxu0
    %396 = vmatprep.mubr.bf16.mxu0 0
    %397 = vmatmul.mubr.bf16.gmra.mrb[0].mxu0 %v323
    %v398 = vpop.f32.mrb[0].mxu0
    %v399 = vadd.f32 %v278, %v398
    %v400 = vpop.f32.mrb[0].mxu0
    %v401 = vpop.f32.mrb[0].mxu0
    %v402 = vadd.f32 %v279, %v401
    %v403 = vpop.f32.mrb[0].mxu0
    %404 = vmatprep.mubr.bf16.mxu0 0
    %405 = vmatmul.mubr.bf16.gmra.mrb[0].mxu0 %v326
    %v406 = vpop.f32.mrb[0].mxu0
    %v407 = vadd.f32 %v280, %v406
    %v408 = vpop.f32.mrb[0].mxu0
    %v409 = vpop.f32.mrb[0].mxu0
    %v410 = vadd.f32 %v281, %v409
    %v411 = vpop.f32.mrb[0].mxu0
    %412 = vmatprep.mubr.bf16.mxu0 0
    %413 = vmatmul.mubr.bf16.gmra.mrb[0].mxu0 %v329
    %v414 = vpop.f32.mrb[0].mxu0
    %v415 = vadd.f32 %v282, %v414
    %v416 = vpop.f32.mrb[0].mxu0
    %v417 = vpop.f32.mrb[0].mxu0
    %v418 = vadd.f32 %v283, %v417
    %v419 = vpop.f32.mrb[0].mxu0
    %420 = vmatprep.mubr.bf16.mxu0 0
    %421 = vmatmul.mubr.bf16.gmra.mrb[0].mxu0 %v332
    %v422 = vpop.f32.mrb[0].mxu0
    %v423 = vadd.f32 %v284, %v422
    %v424 = vpop.f32.mrb[0].mxu0
    %v425 = vpop.f32.mrb[0].mxu0
    %v426 = vadd.f32 %v285, %v425
    %v427 = vpop.f32.mrb[0].mxu0
    %428 = vmatprep.mubr.bf16.mxu0 0
    %429 = vmatmul.mubr.bf16.gmra.mrb[0].mxu0 %v335
    %v430 = vpop.f32.mrb[0].mxu0
    %v431 = vadd.f32 %v286, %v430
    %v432 = vpop.f32.mrb[0].mxu0
    %v433 = vpop.f32.mrb[0].mxu0
    %v434 = vadd.f32 %v287, %v433
    %v435 = vpop.f32.mrb[0].mxu0
    %436 = vdwg.mxu0
    %vm437 = vcmask 130048
    %v438 = vsel %vm437, %v375, -inf
    %439 = vmax.xlane.f32.xlu0 %v438
    %v440 = vpop.xlane.xlu0 %439
    %v441 = vsel %vm437, %v378, -inf
    %442 = vmax.xlane.f32.xlu0 %v441
    %v443 = vpop.xlane.xlu0 %442
    %v444 = vsel %vm437, %v383, -inf
    %445 = vmax.xlane.f32.xlu0 %v444
    %v446 = vpop.xlane.xlu0 %445
    %v447 = vsel %vm437, %v386, -inf
    %448 = vmax.xlane.f32.xlu0 %v447
    %v449 = vpop.xlane.xlu0 %448
    %v450 = vsel %vm437, %v391, -inf
    %451 = vmax.xlane.f32.xlu0 %v450
    %v452 = vpop.xlane.xlu0 %451
    %v453 = vsel %vm437, %v394, -inf
    %454 = vmax.xlane.f32.xlu0 %v453
    %v455 = vpop.xlane.xlu0 %454
    %v456 = vsel %vm437, %v399, -inf
    %457 = vmax.xlane.f32.xlu0 %v456
    %v458 = vpop.xlane.xlu0 %457
    %v459 = vsel %vm437, %v402, -inf
    %460 = vmax.xlane.f32.xlu0 %v459
    %v461 = vpop.xlane.xlu0 %460
    %v462 = vsel %vm437, %v407, -inf
    %463 = vmax.xlane.f32.xlu0 %v462
    %v464 = vpop.xlane.xlu0 %463
    %v465 = vsel %vm437, %v410, -inf
    %466 = vmax.xlane.f32.xlu0 %v465
    %v467 = vpop.xlane.xlu0 %466
    %v468 = vsel %vm437, %v415, -inf
    %469 = vmax.xlane.f32.xlu0 %v468
    %v470 = vpop.xlane.xlu0 %469
    %v471 = vsel %vm437, %v418, -inf
    %472 = vmax.xlane.f32.xlu0 %v471
    %v473 = vpop.xlane.xlu0 %472
    %v474 = vsel %vm437, %v423, -inf
    %475 = vmax.xlane.f32.xlu0 %v474
    %v476 = vpop.xlane.xlu0 %475
    %v477 = vsel %vm437, %v426, -inf
    %478 = vmax.xlane.f32.xlu0 %v477
    %v479 = vpop.xlane.xlu0 %478
    %v480 = vsel %vm437, %v431, -inf
    %481 = vmax.xlane.f32.xlu0 %v480
    %v482 = vpop.xlane.xlu0 %481
    %v483 = vsel %vm437, %v434, -inf
    %484 = vmax.xlane.f32.xlu0 %v483
    %v485 = vpop.xlane.xlu0 %484
    %v486 = vsub.f32 %v375, %v440
    %v487 = vsub.f32 %v378, %v443
    %v488 = vsub.f32 %v383, %v446
    %v489 = vsub.f32 %v386, %v449
    %v490 = vsub.f32 %v391, %v452
    %v491 = vsub.f32 %v394, %v455
    %v492 = vsub.f32 %v399, %v458
    %v493 = vsub.f32 %v402, %v461
    %v494 = vsub.f32 %v407, %v464
    %v495 = vsub.f32 %v410, %v467
    %v496 = vsub.f32 %v415, %v470
    %v497 = vsub.f32 %v418, %v473
    %v498 = vsub.f32 %v423, %v476
    %v499 = vsub.f32 %v426, %v479
    %v500 = vsub.f32 %v431, %v482
    %v501 = vsub.f32 %v434, %v485
    %v502 = vmul.f32 %v486, 1.442695
    %v503 = vpow.pop %v502
    %v504 = vmul.f32 %v487, 1.442695
    %v505 = vpow.pop %v504
    %v506 = vmul.f32 %v488, 1.442695
    %v507 = vpow.pop %v506
    %v508 = vmul.f32 %v489, 1.442695
    %v509 = vpow.pop %v508
    %v510 = vmul.f32 %v490, 1.442695
    %v511 = vpow.pop %v510
    %v512 = vmul.f32 %v491, 1.442695
    %v513 = vpow.pop %v512
    %v514 = vmul.f32 %v492, 1.442695
    %v515 = vpow.pop %v514
    %v516 = vmul.f32 %v493, 1.442695
    %v517 = vpow.pop %v516
    %v518 = vmul.f32 %v494, 1.442695
    %v519 = vpow.pop %v518
    %v520 = vmul.f32 %v495, 1.442695
    %v521 = vpow.pop %v520
    %v522 = vmul.f32 %v496, 1.442695
    %v523 = vpow.pop %v522
    %v524 = vmul.f32 %v497, 1.442695
    %v525 = vpow.pop %v524
    %v526 = vmul.f32 %v498, 1.442695
    %v527 = vpow.pop %v526
    %v528 = vmul.f32 %v499, 1.442695
    %v529 = vpow.pop %v528
    %v530 = vmul.f32 %v500, 1.442695
    %v531 = vpow.pop %v530
    %v532 = vmul.f32 %v501, 1.442695
    %v533 = vpow.pop %v532
    %v534 = vsel %vm437, %v503, 0.0
    %535 = vadd.xlane.f32.xlu0 %v534
    %v536 = vpop.xlane.xlu0 %535
    %v537 = vsel %vm437, %v505, 0.0
    %538 = vadd.xlane.f32.xlu0 %v537
    %v539 = vpop.xlane.xlu0 %538
    %v540 = vsel %vm437, %v507, 0.0
    %541 = vadd.xlane.f32.xlu0 %v540
    %v542 = vpop.xlane.xlu0 %541
    %v543 = vsel %vm437, %v509, 0.0
    %544 = vadd.xlane.f32.xlu0 %v543
    %v545 = vpop.xlane.xlu0 %544
    %v546 = vsel %vm437, %v511, 0.0
    %547 = vadd.xlane.f32.xlu0 %v546
    %v548 = vpop.xlane.xlu0 %547
    %v549 = vsel %vm437, %v513, 0.0
    %550 = vadd.xlane.f32.xlu0 %v549
    %v551 = vpop.xlane.xlu0 %550
    %v552 = vsel %vm437, %v515, 0.0
    %553 = vadd.xlane.f32.xlu0 %v552
    %v554 = vpop.xlane.xlu0 %553
    %v555 = vsel %vm437, %v517, 0.0
    %556 = vadd.xlane.f32.xlu0 %v555
    %v557 = vpop.xlane.xlu0 %556
    %v558 = vsel %vm437, %v519, 0.0
    %559 = vadd.xlane.f32.xlu0 %v558
    %v560 = vpop.xlane.xlu0 %559
    %v561 = vsel %vm437, %v521, 0.0
    %562 = vadd.xlane.f32.xlu0 %v561
    %v563 = vpop.xlane.xlu0 %562
    %v564 = vsel %vm437, %v523, 0.0
    %565 = vadd.xlane.f32.xlu0 %v564
    %v566 = vpop.xlane.xlu0 %565
    %v567 = vsel %vm437, %v525, 0.0
    %568 = vadd.xlane.f32.xlu0 %v567
    %v569 = vpop.xlane.xlu0 %568
    %v570 = vsel %vm437, %v527, 0.0
    %571 = vadd.xlane.f32.xlu0 %v570
    %v572 = vpop.xlane.xlu0 %571
    %v573 = vsel %vm437, %v529, 0.0
    %574 = vadd.xlane.f32.xlu0 %v573
    %v575 = vpop.xlane.xlu0 %574
    %v576 = vsel %vm437, %v531, 0.0
    %577 = vadd.xlane.f32.xlu0 %v576
    %v578 = vpop.xlane.xlu0 %577
    %v579 = vsel %vm437, %v533, 0.0
    %580 = vadd.xlane.f32.xlu0 %v579
    %v581 = vpop.xlane.xlu0 %580
    %v582 = vrcp.pop %v536
    %v583 = vrcp.pop %v539
    %v584 = vrcp.pop %v542
    %v585 = vrcp.pop %v545
    %v586 = vrcp.pop %v548
    %v587 = vrcp.pop %v551
    %v588 = vrcp.pop %v554
    %v589 = vrcp.pop %v557
    %v590 = vrcp.pop %v560
    %v591 = vrcp.pop %v563
    %v592 = vrcp.pop %v566
    %v593 = vrcp.pop %v569
    %v594 = vrcp.pop %v572
    %v595 = vrcp.pop %v575
    %v596 = vrcp.pop %v578
    %v597 = vrcp.pop %v581
    %v598 = vmul.f32 %v503, %v582
    %v599 = vmul.f32 %v505, %v583
    %v600 = vmul.f32 %v507, %v584
    %v601 = vmul.f32 %v509, %v585
    %v602 = vmul.f32 %v511, %v586
    %v603 = vmul.f32 %v513, %v587
    %v604 = vmul.f32 %v515, %v588
    %v605 = vmul.f32 %v517, %v589
    %v606 = vmul.f32 %v519, %v590
    %v607 = vmul.f32 %v521, %v591
    %v608 = vmul.f32 %v523, %v592
    %v609 = vmul.f32 %v525, %v593
    %v610 = vmul.f32 %v527, %v594
    %v611 = vmul.f32 %v529, %v595
    %v612 = vmul.f32 %v531, %v596
    %v613 = vmul.f32 %v533, %v597
    %v614 = vpack.c.bf16 %v599, %v598
    %v615 = vpack.c.bf16 %v601, %v600
    %v616 = vpack.c.bf16 %v603, %v602
    %v617 = vpack.c.bf16 %v605, %v604
    %v618 = vpack.c.bf16 %v607, %v606
    %v619 = vpack.c.bf16 %v609, %v608
    %v620 = vpack.c.bf16 %v611, %v610
    %v621 = vpack.c.bf16 %v613, %v612
    %v622 = vpack.c.bf16 %v237, %v234
    %v624 = vsel %vm437, %v614, 0
    %v627 = vsel %vm437, %v615, 0
    %v630 = vsel %vm437, %v616, 0
    %v633 = vsel %vm437, %v617, 0
    %v636 = vsel %vm437, %v618, 0
    %v639 = vsel %vm437, %v619, 0
    %v642 = vsel %vm437, %v620, 0
    %v645 = vsel %vm437, %v621, 0
    %647 = vmatprep.subr.bf16.mxu0 0
    %648 = vmatpush1.bf16.msra.mxu0 %v622
    %649 = vmatprep.subr.bf16.mxu0 0
    %650 = vmatpush1.bf16.msra.mxu0 0
    %651 = vmatprep.subr.bf16.mxu0 0
    %652 = vmatpush1.bf16.msra.mxu0 0
    %653 = vmatprep.subr.bf16.mxu0 0
    %654 = vmatpush1.bf16.msra.mxu0 0
    %655 = vmatprep.subr.bf16.mxu0 0
    %656 = vmatpush1.bf16.msra.mxu0 0
    %657 = vmatprep.subr.bf16.mxu0 0
    %658 = vmatpush1.bf16.msra.mxu0 0
    %659 = vmatprep.subr.bf16.mxu0 0
    %660 = vmatpush1.bf16.msra.mxu0 0
    %661 = vmatprep.subr.bf16.mxu0 0
    %662 = vmatpush1.bf16.msra.mxu0 0
    %663 = vmatprep.subr.bf16.mxu0 0
    %664 = vmatpush1.bf16.msra.mxu0 0
    %665 = vmatprep.subr.bf16.mxu0 0
    %666 = vmatpush1.bf16.msra.mxu0 0
    %667 = vmatprep.subr.bf16.mxu0 0
    %668 = vmatpush1.bf16.msra.mxu0 0
    %669 = vmatprep.subr.bf16.mxu0 0
    %670 = vmatpush1.bf16.msra.mxu0 0
    %671 = vmatprep.subr.bf16.mxu0 0
    %672 = vmatpush1.bf16.msra.mxu0 0
    %673 = vmatprep.subr.bf16.mxu0 0
    %674 = vmatpush1.bf16.msra.mxu0 0
    %675 = vmatprep.subr.bf16.mxu0 0
    %676 = vmatpush1.bf16.msra.mxu0 0
    %677 = vmatprep.subr.bf16.mxu0 0
    %678 = vmatpush1.bf16.msra.mxu0 0
    %679 = vmatprep.mubr.bf16.mxu0 0
    %680 = vmatmul.mubr.bf16.gmra.mrb[0].mxu0 %v624
    %v681 = vpop.f32.mrb[0].mxu0
    %v682 = vadd.f32 0.0, %v681
    %v683 = vpop.f32.mrb[0].mxu0
    %v684 = vpop.f32.mrb[0].mxu0
    %v685 = vadd.f32 0.0, %v684
    %v686 = vpop.f32.mrb[0].mxu0
    %687 = vmatprep.mubr.bf16.mxu0 0
    %688 = vmatmul.mubr.bf16.gmra.mrb[0].mxu0 %v627
    %v689 = vpop.f32.mrb[0].mxu0
    %v690 = vadd.f32 0.0, %v689
    %v691 = vpop.f32.mrb[0].mxu0
    %v692 = vpop.f32.mrb[0].mxu0
    %v693 = vadd.f32 0.0, %v692
    %v694 = vpop.f32.mrb[0].mxu0
    %695 = vmatprep.mubr.bf16.mxu0 0
    %696 = vmatmul.mubr.bf16.gmra.mrb[0].mxu0 %v630
    %v697 = vpop.f32.mrb[0].mxu0
    %v698 = vadd.f32 0.0, %v697
    %v699 = vpop.f32.mrb[0].mxu0
    %v700 = vpop.f32.mrb[0].mxu0
    %v701 = vadd.f32 0.0, %v700
    %v702 = vpop.f32.mrb[0].mxu0
    %703 = vmatprep.mubr.bf16.mxu0 0
    %704 = vmatmul.mubr.bf16.gmra.mrb[0].mxu0 %v633
    %v705 = vpop.f32.mrb[0].mxu0
    %v706 = vadd.f32 0.0, %v705
    %v707 = vpop.f32.mrb[0].mxu0
    %v708 = vpop.f32.mrb[0].mxu0
    %v709 = vadd.f32 0.0, %v708
    %v710 = vpop.f32.mrb[0].mxu0
    %711 = vmatprep.mubr.bf16.mxu0 0
    %712 = vmatmul.mubr.bf16.gmra.mrb[0].mxu0 %v636
    %v713 = vpop.f32.mrb[0].mxu0
    %v714 = vadd.f32 0.0, %v713
    %v715 = vpop.f32.mrb[0].mxu0
    %v716 = vpop.f32.mrb[0].mxu0
    %v717 = vadd.f32 0.0, %v716
    %v718 = vpop.f32.mrb[0].mxu0
    %719 = vmatprep.mubr.bf16.mxu0 0
    %720 = vmatmul.mubr.bf16.gmra.mrb[0].mxu0 %v639
    %v721 = vpop.f32.mrb[0].mxu0
    %v722 = vadd.f32 0.0, %v721
    %v723 = vpop.f32.mrb[0].mxu0
    %v724 = vpop.f32.mrb[0].mxu0
    %v725 = vadd.f32 0.0, %v724
    %v726 = vpop.f32.mrb[0].mxu0
    %727 = vmatprep.mubr.bf16.mxu0 0
    %728 = vmatmul.mubr.bf16.gmra.mrb[0].mxu0 %v642
    %v729 = vpop.f32.mrb[0].mxu0
    %v730 = vadd.f32 0.0, %v729
    %v731 = vpop.f32.mrb[0].mxu0
    %v732 = vpop.f32.mrb[0].mxu0
    %v733 = vadd.f32 0.0, %v732
    %v734 = vpop.f32.mrb[0].mxu0
    %735 = vmatprep.mubr.bf16.mxu0 0
    %736 = vmatmul.mubr.bf16.gmra.mrb[0].mxu0 %v645
    %v737 = vpop.f32.mrb[0].mxu0
    %v738 = vadd.f32 0.0, %v737
    %v739 = vpop.f32.mrb[0].mxu0
    %v740 = vpop.f32.mrb[0].mxu0
    %v741 = vadd.f32 0.0, %v740
    %v742 = vpop.f32.mrb[0].mxu0
    %743 = vdwg.mxu0
    %v744 = vmul.f32 %v682, %v256
    %v745 = vmul.f32 %v685, %v257
    %v746 = vmul.f32 %v690, %v258
    %v747 = vmul.f32 %v693, %v259
    %v748 = vmul.f32 %v698, %v260
    %v749 = vmul.f32 %v701, %v261
    %v750 = vmul.f32 %v706, %v262
    %v751 = vmul.f32 %v709, %v263
    %v752 = vmul.f32 %v714, %v264
    %v753 = vmul.f32 %v717, %v265
    %v754 = vmul.f32 %v722, %v266
    %v755 = vmul.f32 %v725, %v267
    %v756 = vmul.f32 %v730, %v268
    %v757 = vmul.f32 %v733, %v269
    %v758 = vmul.f32 %v738, %v270
    %v759 = vmul.f32 %v741, %v271
    %v760 = vadd.f32 %v744, %v746
    %v761 = vadd.f32 %v745, %v747
    %v762 = vadd.f32 %v760, %v748
    %v763 = vadd.f32 %v761, %v749
    %v764 = vadd.f32 %v762, %v750
    %v765 = vadd.f32 %v763, %v751
    %v766 = vadd.f32 %v764, %v752
    %v767 = vadd.f32 %v765, %v753
    %v768 = vadd.f32 %v766, %v754
    %v769 = vadd.f32 %v767, %v755
    %v770 = vadd.f32 %v768, %v756
    %v771 = vadd.f32 %v769, %v757
    %v772 = vadd.f32 %v770, %v758
    %v773 = vadd.f32 %v771, %v759
    %v774 = vpack.c.bf16 %v773, %v772
    %v775 = vld [vmem:[%s3] sm:$0xf]
    %v776 = vld [vmem:[%s3 + $0x4] sm:$0xf]
    %v777 = vld [vmem:[%s3 + $0x8] sm:$0xf]
    %v778 = vld [vmem:[%s3 + $0xc] sm:$0xf]
    %v783 = vunpack.c.l.b16 %v775
    %v784 = vunpack.c.l.b16 %v776
    %v785 = vunpack.c.l.b16 %v777
    %v786 = vunpack.c.l.b16 %v778
    %v787 = vpack.c.b16 %v784, %v783
    %v788 = vpack.c.b16 %v786, %v785
    %v792 = vsel %vm29, %v774, 0
    %794 = vmatprep.subr.bf16.mxu0 0
    %795 = vmatpush1.bf16.msra.mxu0 %v787
    %796 = vmatprep.subr.bf16.mxu0 0
    %797 = vmatpush1.bf16.msra.mxu0 %v788
    %798 = vmatprep.subr.bf16.mxu0 0
    %799 = vmatpush1.bf16.msra.mxu0 0
    %800 = vmatprep.subr.bf16.mxu0 0
    %801 = vmatpush1.bf16.msra.mxu0 0
    %802 = vmatprep.subr.bf16.mxu0 0
    %803 = vmatpush1.bf16.msra.mxu0 0
    %804 = vmatprep.subr.bf16.mxu0 0
    %805 = vmatpush1.bf16.msra.mxu0 0
    %806 = vmatprep.subr.bf16.mxu0 0
    %807 = vmatpush1.bf16.msra.mxu0 0
    %808 = vmatprep.subr.bf16.mxu0 0
    %809 = vmatpush1.bf16.msra.mxu0 0
    %810 = vmatprep.subr.bf16.mxu0 0
    %811 = vmatpush1.bf16.msra.mxu0 0
    %812 = vmatprep.subr.bf16.mxu0 0
    %813 = vmatpush1.bf16.msra.mxu0 0
    %814 = vmatprep.subr.bf16.mxu0 0
    %815 = vmatpush1.bf16.msra.mxu0 0
    %816 = vmatprep.subr.bf16.mxu0 0
    %817 = vmatpush1.bf16.msra.mxu0 0
    %818 = vmatprep.subr.bf16.mxu0 0
    %819 = vmatpush1.bf16.msra.mxu0 0
    %820 = vmatprep.subr.bf16.mxu0 0
    %821 = vmatpush1.bf16.msra.mxu0 0
    %822 = vmatprep.subr.bf16.mxu0 0
    %823 = vmatpush1.bf16.msra.mxu0 0
    %824 = vmatprep.subr.bf16.mxu0 0
    %825 = vmatpush1.bf16.msra.mxu0 0
    %826 = vmatprep.mubr.bf16.mxu0 0
    %827 = vmatmul.mubr.bf16.gmra.mrb[0].mxu0 %v792
    %v828 = vpop.f32.mrb[0].mxu0
    %v829 = vadd.f32 0.0, %v828
    %v830 = vpop.f32.mrb[0].mxu0
    %v831 = vpop.f32.mrb[0].mxu0
    %v832 = vadd.f32 0.0, %v831
    %v833 = vpop.f32.mrb[0].mxu0
    %834 = vdwg.mxu0
    %v835 = vadd.f32 %v25, %v829
    %v836 = vadd.f32 %v26, %v832
    %v837 = vmul.f32 %v835, %v835
    %v838 = vmul.f32 %v836, %v836
    %v839 = vsel %vm29, %v837, 0.0
    %840 = vadd.xlane.f32.xlu0 %v839
    %v841 = vpop.xlane.xlu0 %840
    %v842 = vsel %vm29, %v838, 0.0
    %843 = vadd.xlane.f32.xlu0 %v842
    %v844 = vpop.xlane.xlu0 %843
    %v845 = vmul.f32 %v841, %v36
    %v846 = vmul.f32 %v844, %v36
    %v847 = vadd.f32 %v845, 1e-06
    %v848 = vadd.f32 %v846, 1e-06
    %v849 = vrsqrt.pop %v847
    %v850 = vrsqrt.pop %v848
    %v851 = vmul.f32 %v835, %v849
    %v852 = vmul.f32 %v836, %v850
    %v853 = vpack.c.bf16 %v852, %v851
    %v854 = vld [vmem:[%s4] sm:$0xff]
    %v855 = vld [vmem:[%s4 + $0x8] sm:$0xff]
    %v856 = vld [vmem:[%s4 + $0x10] sm:$0xff]
    %v857 = vld [vmem:[%s4 + $0x18] sm:$0xff]
    %v858 = vld [vmem:[%s4 + $0x20] sm:$0xff]
    %v859 = vld [vmem:[%s4 + $0x28] sm:$0xff]
    %v860 = vld [vmem:[%s4 + $0x30] sm:$0xff]
    %v861 = vld [vmem:[%s4 + $0x38] sm:$0xff]
    %v870 = vunpack.c.l.b16 %v854
    %v871 = vunpack.c.h.b16 %v854
    %v872 = vunpack.c.l.b16 %v855
    %v873 = vunpack.c.h.b16 %v855
    %v874 = vunpack.c.l.b16 %v856
    %v875 = vunpack.c.h.b16 %v856
    %v876 = vunpack.c.l.b16 %v857
    %v877 = vunpack.c.h.b16 %v857
    %v878 = vunpack.c.l.b16 %v858
    %v879 = vunpack.c.h.b16 %v858
    %v880 = vunpack.c.l.b16 %v859
    %v881 = vunpack.c.h.b16 %v859
    %v882 = vunpack.c.l.b16 %v860
    %v883 = vunpack.c.h.b16 %v860
    %v884 = vunpack.c.l.b16 %v861
    %v885 = vunpack.c.h.b16 %v861
    %v886 = vpack.c.b16 %v874, %v870
    %v887 = vpack.c.b16 %v875, %v871
    %v888 = vpack.c.b16 %v876, %v872
    %v889 = vpack.c.b16 %v877, %v873
    %v890 = vpack.c.b16 %v882, %v878
    %v891 = vpack.c.b16 %v883, %v879
    %v892 = vpack.c.b16 %v884, %v880
    %v893 = vpack.c.b16 %v885, %v881
    %v903 = vsel %vm29, %v853, 0
    %905 = vmatprep.subr.bf16.mxu0 %v887
    %906 = vmatpush1.bf16.msra.mxu0 %v886
    %907 = vmatprep.subr.bf16.mxu0 %v891
    %908 = vmatpush1.bf16.msra.mxu0 %v890
    %909 = vmatprep.subr.bf16.mxu0 0
    %910 = vmatpush1.bf16.msra.mxu0 0
    %911 = vmatprep.subr.bf16.mxu0 0
    %912 = vmatpush1.bf16.msra.mxu0 0
    %913 = vmatprep.subr.bf16.mxu0 0
    %914 = vmatpush1.bf16.msra.mxu0 0
    %915 = vmatprep.subr.bf16.mxu0 0
    %916 = vmatpush1.bf16.msra.mxu0 0
    %917 = vmatprep.subr.bf16.mxu0 0
    %918 = vmatpush1.bf16.msra.mxu0 0
    %919 = vmatprep.subr.bf16.mxu0 0
    %920 = vmatpush1.bf16.msra.mxu0 0
    %921 = vmatprep.subr.bf16.mxu0 0
    %922 = vmatpush1.bf16.msra.mxu0 0
    %923 = vmatprep.subr.bf16.mxu0 0
    %924 = vmatpush1.bf16.msra.mxu0 0
    %925 = vmatprep.subr.bf16.mxu0 0
    %926 = vmatpush1.bf16.msra.mxu0 0
    %927 = vmatprep.subr.bf16.mxu0 0
    %928 = vmatpush1.bf16.msra.mxu0 0
    %929 = vmatprep.subr.bf16.mxu0 0
    %930 = vmatpush1.bf16.msra.mxu0 0
    %931 = vmatprep.subr.bf16.mxu0 0
    %932 = vmatpush1.bf16.msra.mxu0 0
    %933 = vmatprep.subr.bf16.mxu0 0
    %934 = vmatpush1.bf16.msra.mxu0 0
    %935 = vmatprep.subr.bf16.mxu0 0
    %936 = vmatpush1.bf16.msra.mxu0 0
    %937 = vmatprep.mubr.bf16.mxu0 0
    %938 = vmatmul.mubr.bf16.gmra.mrb[0].mxu0 %v903
    %v939 = vpop.f32.mrb[0].mxu0
    %v940 = vadd.f32 0.0, %v939
    %v941 = vpop.f32.mrb[0].mxu0
    %v942 = vadd.f32 0.0, %v941
    %v943 = vpop.f32.mrb[0].mxu0
    %v944 = vadd.f32 0.0, %v943
    %v945 = vpop.f32.mrb[0].mxu0
    %v946 = vadd.f32 0.0, %v945
    %947 = vdwg.mxu0
    %948 = vmatprep.subr.bf16.mxu0 %v889
    %949 = vmatpush1.bf16.msra.mxu0 %v888
    %950 = vmatprep.subr.bf16.mxu0 %v893
    %951 = vmatpush1.bf16.msra.mxu0 %v892
    %952 = vmatprep.subr.bf16.mxu0 0
    %953 = vmatpush1.bf16.msra.mxu0 0
    %954 = vmatprep.subr.bf16.mxu0 0
    %955 = vmatpush1.bf16.msra.mxu0 0
    %956 = vmatprep.subr.bf16.mxu0 0
    %957 = vmatpush1.bf16.msra.mxu0 0
    %958 = vmatprep.subr.bf16.mxu0 0
    %959 = vmatpush1.bf16.msra.mxu0 0
    %960 = vmatprep.subr.bf16.mxu0 0
    %961 = vmatpush1.bf16.msra.mxu0 0
    %962 = vmatprep.subr.bf16.mxu0 0
    %963 = vmatpush1.bf16.msra.mxu0 0
    %964 = vmatprep.subr.bf16.mxu0 0
    %965 = vmatpush1.bf16.msra.mxu0 0
    %966 = vmatprep.subr.bf16.mxu0 0
    %967 = vmatpush1.bf16.msra.mxu0 0
    %968 = vmatprep.subr.bf16.mxu0 0
    %969 = vmatpush1.bf16.msra.mxu0 0
    %970 = vmatprep.subr.bf16.mxu0 0
    %971 = vmatpush1.bf16.msra.mxu0 0
    %972 = vmatprep.subr.bf16.mxu0 0
    %973 = vmatpush1.bf16.msra.mxu0 0
    %974 = vmatprep.subr.bf16.mxu0 0
    %975 = vmatpush1.bf16.msra.mxu0 0
    %976 = vmatprep.subr.bf16.mxu0 0
    %977 = vmatpush1.bf16.msra.mxu0 0
    %978 = vmatprep.subr.bf16.mxu0 0
    %979 = vmatpush1.bf16.msra.mxu0 0
    %980 = vmatprep.mubr.bf16.mxu0 0
    %981 = vmatmul.mubr.bf16.gmra.mrb[0].mxu0 %v903
    %v982 = vpop.f32.mrb[0].mxu0
    %v983 = vadd.f32 0.0, %v982
    %v984 = vpop.f32.mrb[0].mxu0
    %v985 = vadd.f32 0.0, %v984
    %v986 = vpop.f32.mrb[0].mxu0
    %v987 = vadd.f32 0.0, %v986
    %v988 = vpop.f32.mrb[0].mxu0
    %v989 = vadd.f32 0.0, %v988
    %990 = vdwg.mxu0
    %v991 = vmul.f32 %v940, 0.5
    %v992 = vmul.f32 %v942, 0.5
    %v993 = vmul.f32 %v944, 0.5
    %v994 = vmul.f32 %v946, 0.5
    %v995 = vtanh.pop %v991
    %v996 = vtanh.pop %v992
    %v997 = vtanh.pop %v993
    %v998 = vtanh.pop %v994
    %v999 = vadd.f32 %v995, 1.0
    %v1000 = vadd.f32 %v996, 1.0
    %v1001 = vadd.f32 %v997, 1.0
    %v1002 = vadd.f32 %v998, 1.0
    %v1003 = vmul.f32 %v999, 0.5
    %v1004 = vmul.f32 %v1000, 0.5
    %v1005 = vmul.f32 %v1001, 0.5
    %v1006 = vmul.f32 %v1002, 0.5
    %v1007 = vmul.f32 %v940, %v1003
    %v1008 = vmul.f32 %v942, %v1004
    %v1009 = vmul.f32 %v944, %v1005
    %v1010 = vmul.f32 %v946, %v1006
    %v1011 = vmul.f32 %v1007, %v983
    %v1012 = vmul.f32 %v1008, %v985
    %v1013 = vmul.f32 %v1009, %v987
    %v1014 = vmul.f32 %v1010, %v989
    %v1015 = vpack.c.bf16 %v1013, %v1011
    %v1016 = vpack.c.bf16 %v1014, %v1012
    %v1017 = vld [vmem:[%s5] sm:$0xf]
    %v1018 = vld [vmem:[%s5 + $0x4] sm:$0xf]
    %v1019 = vld [vmem:[%s5 + $0x8] sm:$0xf]
    %v1020 = vld [vmem:[%s5 + $0xc] sm:$0xf]
    %v1021 = vld [vmem:[%s5 + $0x10] sm:$0xf]
    %v1022 = vld [vmem:[%s5 + $0x14] sm:$0xf]
    %v1023 = vld [vmem:[%s5 + $0x18] sm:$0xf]
    %v1024 = vld [vmem:[%s5 + $0x1c] sm:$0xf]
    %v1025 = vld [vmem:[%s5 + $0x20] sm:$0xf]
    %v1026 = vld [vmem:[%s5 + $0x24] sm:$0xf]
    %v1027 = vld [vmem:[%s5 + $0x28] sm:$0xf]
    %v1028 = vld [vmem:[%s5 + $0x2c] sm:$0xf]
    %v1029 = vld [vmem:[%s5 + $0x30] sm:$0xf]
    %v1030 = vld [vmem:[%s5 + $0x34] sm:$0xf]
    %v1031 = vld [vmem:[%s5 + $0x38] sm:$0xf]
    %v1032 = vld [vmem:[%s5 + $0x3c] sm:$0xf]
    %v1033 = vld [vmem:[%s5 + $0x40] sm:$0xf]
    %v1034 = vld [vmem:[%s5 + $0x44] sm:$0xf]
    %v1035 = vld [vmem:[%s5 + $0x48] sm:$0xf]
    %v1036 = vld [vmem:[%s5 + $0x4c] sm:$0xf]
    %v1037 = vld [vmem:[%s5 + $0x50] sm:$0xf]
    %v1038 = vld [vmem:[%s5 + $0x54] sm:$0xf]
    %v1039 = vld [vmem:[%s5 + $0x58] sm:$0xf]
    %v1040 = vld [vmem:[%s5 + $0x5c] sm:$0xf]
    %v1041 = vld [vmem:[%s5 + $0x60] sm:$0xf]
    %v1042 = vld [vmem:[%s5 + $0x64] sm:$0xf]
    %v1043 = vld [vmem:[%s5 + $0x68] sm:$0xf]
    %v1044 = vld [vmem:[%s5 + $0x6c] sm:$0xf]
    %v1045 = vld [vmem:[%s5 + $0x70] sm:$0xf]
    %v1046 = vld [vmem:[%s5 + $0x74] sm:$0xf]
    %v1047 = vld [vmem:[%s5 + $0x78] sm:$0xf]
    %v1048 = vld [vmem:[%s5 + $0x7c] sm:$0xf]
    %v1081 = vunpack.c.l.b16 %v1017
    %v1082 = vunpack.c.l.b16 %v1018
    %v1083 = vunpack.c.l.b16 %v1019
    %v1084 = vunpack.c.l.b16 %v1020
    %v1085 = vunpack.c.l.b16 %v1021
    %v1086 = vunpack.c.l.b16 %v1022
    %v1087 = vunpack.c.l.b16 %v1023
    %v1088 = vunpack.c.l.b16 %v1024
    %v1089 = vunpack.c.l.b16 %v1025
    %v1090 = vunpack.c.l.b16 %v1026
    %v1091 = vunpack.c.l.b16 %v1027
    %v1092 = vunpack.c.l.b16 %v1028
    %v1093 = vunpack.c.l.b16 %v1029
    %v1094 = vunpack.c.l.b16 %v1030
    %v1095 = vunpack.c.l.b16 %v1031
    %v1096 = vunpack.c.l.b16 %v1032
    %v1097 = vunpack.c.l.b16 %v1033
    %v1098 = vunpack.c.l.b16 %v1034
    %v1099 = vunpack.c.l.b16 %v1035
    %v1100 = vunpack.c.l.b16 %v1036
    %v1101 = vunpack.c.l.b16 %v1037
    %v1102 = vunpack.c.l.b16 %v1038
    %v1103 = vunpack.c.l.b16 %v1039
    %v1104 = vunpack.c.l.b16 %v1040
    %v1105 = vunpack.c.l.b16 %v1041
    %v1106 = vunpack.c.l.b16 %v1042
    %v1107 = vunpack.c.l.b16 %v1043
    %v1108 = vunpack.c.l.b16 %v1044
    %v1109 = vunpack.c.l.b16 %v1045
    %v1110 = vunpack.c.l.b16 %v1046
    %v1111 = vunpack.c.l.b16 %v1047
    %v1112 = vunpack.c.l.b16 %v1048
    %v1113 = vpack.c.b16 %v1082, %v1081
    %v1114 = vpack.c.b16 %v1084, %v1083
    %v1115 = vpack.c.b16 %v1086, %v1085
    %v1116 = vpack.c.b16 %v1088, %v1087
    %v1117 = vpack.c.b16 %v1090, %v1089
    %v1118 = vpack.c.b16 %v1092, %v1091
    %v1119 = vpack.c.b16 %v1094, %v1093
    %v1120 = vpack.c.b16 %v1096, %v1095
    %v1121 = vpack.c.b16 %v1098, %v1097
    %v1122 = vpack.c.b16 %v1100, %v1099
    %v1123 = vpack.c.b16 %v1102, %v1101
    %v1124 = vpack.c.b16 %v1104, %v1103
    %v1125 = vpack.c.b16 %v1106, %v1105
    %v1126 = vpack.c.b16 %v1108, %v1107
    %v1127 = vpack.c.b16 %v1110, %v1109
    %v1128 = vpack.c.b16 %v1112, %v1111
    %1145 = vmatprep.subr.bf16.mxu0 0
    %1146 = vmatpush1.bf16.msra.mxu0 %v1113
    %1147 = vmatprep.subr.bf16.mxu0 0
    %1148 = vmatpush1.bf16.msra.mxu0 %v1114
    %1149 = vmatprep.subr.bf16.mxu0 0
    %1150 = vmatpush1.bf16.msra.mxu0 %v1115
    %1151 = vmatprep.subr.bf16.mxu0 0
    %1152 = vmatpush1.bf16.msra.mxu0 %v1116
    %1153 = vmatprep.subr.bf16.mxu0 0
    %1154 = vmatpush1.bf16.msra.mxu0 %v1117
    %1155 = vmatprep.subr.bf16.mxu0 0
    %1156 = vmatpush1.bf16.msra.mxu0 %v1118
    %1157 = vmatprep.subr.bf16.mxu0 0
    %1158 = vmatpush1.bf16.msra.mxu0 %v1119
    %1159 = vmatprep.subr.bf16.mxu0 0
    %1160 = vmatpush1.bf16.msra.mxu0 %v1120
    %1161 = vmatprep.subr.bf16.mxu0 0
    %1162 = vmatpush1.bf16.msra.mxu0 %v1121
    %1163 = vmatprep.subr.bf16.mxu0 0
    %1164 = vmatpush1.bf16.msra.mxu0 %v1122
    %1165 = vmatprep.subr.bf16.mxu0 0
    %1166 = vmatpush1.bf16.msra.mxu0 %v1123
    %1167 = vmatprep.subr.bf16.mxu0 0
    %1168 = vmatpush1.bf16.msra.mxu0 %v1124
    %1169 = vmatprep.subr.bf16.mxu0 0
    %1170 = vmatpush1.bf16.msra.mxu0 %v1125
    %1171 = vmatprep.subr.bf16.mxu0 0
    %1172 = vmatpush1.bf16.msra.mxu0 %v1126
    %1173 = vmatprep.subr.bf16.mxu0 0
    %1174 = vmatpush1.bf16.msra.mxu0 %v1127
    %1175 = vmatprep.subr.bf16.mxu0 0
    %1176 = vmatpush1.bf16.msra.mxu0 %v1128
    %1177 = vmatprep.mubr.bf16.mxu0 %v1016
    %1178 = vmatmul.mubr.bf16.gmra.mrb[0].mxu0 %v1015
    %v1179 = vpop.f32.mrb[0].mxu0
    %v1180 = vadd.f32 0.0, %v1179
    %v1181 = vpop.f32.mrb[0].mxu0
    %v1182 = vpop.f32.mrb[0].mxu0
    %v1183 = vadd.f32 0.0, %v1182
    %v1184 = vpop.f32.mrb[0].mxu0
    %1185 = vdwg.mxu0
    %v1186 = vadd.f32 %v835, %v1180
    %v1187 = vadd.f32 %v836, %v1183
    %1188 = vst.msk [vmem:[#allocation2] sm:$0xff] %vm29, %v1186
    %1189 = vst.msk [vmem:[#allocation2 + $0x8] sm:$0xff] %vm29, %v1187
    // Predicated region
    $region26: #{transformer_block_fwd.1} parent=1 // pred_check
      _
    $region27: #{transformer_block_fwd.1} parent=1 // pred_check_branch
      %1191 = sbr.rel (0) target = $region29
    $region28: #{transformer_block_fwd.1} parent=1 // pred_region
      %s1193 = ssub.s32 256, 256
      %1194 = vsyncadd [#allocation3], %s1193
      %s1195 = sshll.u32 [#allocation2], 4
      %s1196 = int_to_ptr.vmem [resolvable:$true] %s1195
      %1201 = dma.vmem_to_hbm [thread:$0]  %s1196, 256, %s6, [#allocation3], 128, 128, 8
    $region29: #{transformer_block_fwd.1} parent=1 // pred_fallthru
      _
    // Predicated region
    $region30: #{transformer_block_fwd.1} parent=1 // pred_check
      _
    $region31: #{transformer_block_fwd.1} parent=1 // pred_check_branch
      %1203 = sbr.rel (0) target = $region33
    $region32: #{transformer_block_fwd.1} parent=1 // pred_region
      %1204 = dma.done [#allocation3], 256
    $region33: #{transformer_block_fwd.1} parent=1 // pred_fallthru
      _
    %1205 = vsyncpa [#allocation3], 1

</llo_original>
